<compile_context>
chip_gen: v6e
topology: v6e:2x2x1
jax: 0.10.0
libtpu: 0.0.40
codegen_flags: <defaults>
</compile_context>

<pallas_src>
import jax
import jax.numpy as jnp
from jax.experimental import pallas as pl
from jax.experimental.pallas import tpu as pltpu


# ---------------------------------------------------------------------------
# Small helpers
# ---------------------------------------------------------------------------
def _cdiv(a: int, b: int) -> int:
    return (a + b - 1) // b


def _round_up(x: int, m: int) -> int:
    return _cdiv(x, m) * m


def _hadamard(n: int) -> jnp.ndarray:
    """Dense Sylvester Hadamard matrix (reference path only; n = power of 2)."""
    assert n > 0 and (n & (n - 1)) == 0, "Hadamard size must be a power of 2"
    h = jnp.array([[1.0]], dtype=jnp.float32)
    while h.shape[0] < n:
        h = jnp.block([[h, h], [h, -h]])
    return h


def _fwht(x: jnp.ndarray, axis: int) -> jnp.ndarray:
    """Multiply by the (unnormalized) Sylvester Hadamard matrix along `axis`.

    O(n^2 log n) instead of a dense n^3 GEMM; used only at one-time prep.
    """
    n = x.shape[axis]
    # TODO(synk): real QuIP# uses get_hadK (had_left/K_left factors) to support
    # non-power-of-two dims; only the power-of-two path is implemented here.
    assert n > 0 and (n & (n - 1)) == 0, "Hadamard size must be a power of 2"
    x = jnp.moveaxis(x, axis, 0)
    shape = x.shape
    x = x.reshape(n, -1)
    h = 1
    while h < n:
        x = x.reshape(n // (2 * h), 2, h, -1)
        a = x[:, 0]
        b = x[:, 1]
        x = jnp.concatenate([a + b, a - b], axis=1).reshape(n, -1)
        h *= 2
    return jnp.moveaxis(x.reshape(shape), 0, axis)


def _vmem_capacity_bytes() -> int:
    try:
        return int(pltpu.get_tpu_info().vmem_capacity_bytes)
    except Exception:
        return 64 * 1024 * 1024  # conservative (v7x-sized) fallback


# ---------------------------------------------------------------------------
# Pallas kernel: tiled GEMM (bf16 operands, f32 accumulation),
# finalize applies the f32 output scale (SV*Wscale) and the bias.
# grid = (M/tm, N/tn, K/tk); K is the innermost (reduction) axis.
# ---------------------------------------------------------------------------
def _qlinear_kernel(x_ref, w_ref, scale_ref, b_ref, o_ref, acc_ref):
    k = pl.program_id(2)

    @pl.when(k == 0)
    def _init():
        acc_ref[...] = jnp.zeros_like(acc_ref)

    acc_ref[...] += jnp.dot(x_ref[...], w_ref[...],
                            preferred_element_type=jnp.float32)

    @pl.when(k == pl.num_programs(2) - 1)
    def _finalize():
        o_ref[...] = (acc_ref[...] * scale_ref[...]
                      + b_ref[...]).astype(o_ref.dtype)


# ---------------------------------------------------------------------------
# One-time weight preparation (everything heavy lives here, NOT per call).
# ---------------------------------------------------------------------------
def prepare_quantized_linear(params):
    in_f = int(params["SU"].shape[-1])
    out_f = int(params["SV"].shape[-1])

    # --- decode codebook -> dense W_hat (out_f, in_f) ------------------------
    # TODO(synk): real QuIP# codebooks bit-pack Qidxs (packsz > 1); here
    # packsz=1 so decode is a one-time gather.
    cb = params["codebook"].astype(jnp.float32)
    w_hat = cb[params["Qidxs"].reshape(-1)].reshape(out_f, in_f)

    # --- fold low-rank residual: W_eff = W_hat + resid_scale * (A @ B) -------
    rso = float(params["resid_scale_override"])
    # TODO(synk): resid_scale_override <= 0 normally selects a codebook-specific
    # default residual scale; 1.0 is used for the synthetic codebook.
    resid_scale = (1.0 / rso) if rso > 0 else 1.0
    A = params["A"].astype(jnp.float32)                 # (out_f, rank)
    B = params["B"].astype(jnp.float32)                 # (rank, in_f)
    w_eff = w_hat + resid_scale * (A @ B)               # (out_f, in_f)

    # --- fold input diag + both Hadamards (FWHT) into one bf16 weight --------
    #   W_k = diag(SU/scaleWH) @ (H_in/sqrt(in)) @ W_eff^T @ (H_out/sqrt(out))
    # Output scale (SV*Wscale) stays in f32, applied at kernel finalize.
    d_in = (params["SU"] / params["scaleWH"]).astype(jnp.float32)   # (in_f,)
    d_out = (params["SV"] * params["Wscale"]).astype(jnp.float32)   # (out_f,)

    wt = w_eff.T                                                     # (in_f, out_f)
    wt = _fwht(wt, axis=1) / jnp.sqrt(jnp.float32(out_f))            # @ H_out
    wt = _fwht(wt, axis=0) / jnp.sqrt(jnp.float32(in_f))             # H_in @
    w_k = d_in[:, None] * wt                                         # (in_f, out_f)

    # --- per-generation tile selection ---------------------------------------
    vmem_cap = _vmem_capacity_bytes()
    big_vmem = vmem_cap >= 100 * 1024 * 1024           # v5e / v6e (128 MiB)
    vmem_limit = min((vmem_cap * 3) // 4, 96 * 1024 * 1024)  # 48 MiB on v7x

    tk = min(1024, _round_up(in_f, 128))
    tn_cap = 1024 if big_vmem else 512
    tn = min(tn_cap, _round_up(out_f, 128))
    n_pad0 = _round_up(out_f, 128)
    if not big_vmem and n_pad0 >= 256:
        # v7x: make sure the N grid axis has extent >= 2 so both TensorCores
        # get parallel work even when M collapses to one tile (decode).
        tn = min(tn, _round_up(n_pad0 // 2, 128))
    K_pad = _round_up(in_f, tk)
    N_pad = _round_up(out_f, tn)

    # --- pre-padded, pre-cast kernel operands (no per-call weight traffic) ---
    w_p = jnp.pad(w_k, ((0, K_pad - in_f), (0, N_pad - out_f))).astype(jnp.bfloat16)
    scale_p = jnp.pad(d_out, (0, N_pad - out_f)).reshape(1, N_pad)
    bias = params.get("bias", None)
    if bias is None:
        bias = jnp.zeros((out_f,), jnp.float32)
    b_p = jnp.pad(bias.astype(jnp.float32), (0, N_pad - out_f)).reshape(1, N_pad)

    gather = params.get("ocs_dupe_inds", None)
    if gather is not None and bool(jnp.all(gather == jnp.arange(gather.shape[0],
                                                                dtype=gather.dtype))):
        gather = None  # identity permutation -> skip the per-call gather

    return dict(
        w=w_p, scale=scale_p, bias=b_p, gather_inds=gather,
        in_features=in_f, out_features=out_f,
        tk=tk, tn=tn, K_pad=K_pad, N_pad=N_pad,
        tm_cap=1024 if big_vmem else 512,
        vmem_limit=int(vmem_limit),
    )


# ---------------------------------------------------------------------------
# Per-call forward: gather + reshape + one pad/cast + Pallas GEMM.
# ---------------------------------------------------------------------------
def quantized_linear_forward(x, prepped):
    in_f = prepped["in_features"]
    out_f = prepped["out_features"]

    if prepped["gather_inds"] is not None:
        x = jnp.take(x, prepped["gather_inds"], axis=-1)

    lead = x.shape[:-1]
    x2d = x.reshape(-1, in_f)
    M = x2d.shape[0]
    out_dtype = x2d.dtype

    tk, tn = prepped["tk"], prepped["tn"]
    K_pad, N_pad = prepped["K_pad"], prepped["N_pad"]

    # Balanced M tiling: grid_m blocks of (near-)equal size, minimal padding.
    tm_cap = prepped["tm_cap"]
    grid_m = _cdiv(_round_up(M, 16), tm_cap)
    tm = _round_up(_cdiv(M, grid_m), 16)
    M_pad = _round_up(M, tm)

    # Single pad (only if needed) + single cast to the MXU dtype.
    if M_pad != M or K_pad != in_f:
        x2d = jnp.pad(x2d, ((0, M_pad - M), (0, K_pad - in_f)))
    x_p = x2d.astype(jnp.bfloat16)

    grid = (M_pad // tm, N_pad // tn, K_pad // tk)

    # W stream: 3-deep pipeline once the grid is big enough to benefit.
    def _w_map(i, j, k):
        return (k, j)

    w_spec = pl.BlockSpec((tk, tn), _w_map)
    if grid[0] * grid[1] * grid[2] >= 3:
        try:
            w_spec = pl.BlockSpec((tk, tn), _w_map, pipeline_mode=pl.Buffered(3))
        except TypeError:
            w_spec = pl.BlockSpec((tk, tn), _w_map)

    out_padded = pl.pallas_call(
        _qlinear_kernel,
        out_shape=jax.ShapeDtypeStruct((M_pad, N_pad), out_dtype),
        grid_spec=pltpu.PrefetchScalarGridSpec(
            num_scalar_prefetch=0,
            grid=grid,
            in_specs=[
                pl.BlockSpec((tm, tk), lambda i, j, k: (i, k)),   # x tile
                w_spec,                                           # W tile
                pl.BlockSpec((1, tn), lambda i, j, k: (0, j)),    # out-scale (f32)
                pl.BlockSpec((1, tn), lambda i, j, k: (0, j)),    # bias (f32)
            ],
            out_specs=pl.BlockSpec((tm, tn), lambda i, j, k: (i, j)),
            scratch_shapes=[pltpu.VMEM((tm, tn), jnp.float32)],
        ),
        compiler_params=pltpu.CompilerParams(
            dimension_semantics=("parallel", "parallel", "arbitrary"),
            vmem_limit_bytes=prepped["vmem_limit"],
        ),
    )(x_p, prepped["w"], prepped["scale"], prepped["bias"])

    out2d = out_padded[:M, :out_f]
    return out2d.reshape(lead + (out_f,))


# ---------------------------------------------------------------------------
# Plain-JAX f32 reference with the original (unfused) semantics.
# ---------------------------------------------------------------------------
def reference_forward(x, params):
    in_f = params["SU"].shape[-1]
    out_f = params["SV"].shape[-1]
    x = jnp.take(x, params["ocs_dupe_inds"], axis=-1)
    lead = x.shape[:-1]
    x2d = x.reshape(-1, in_f).astype(jnp.float32)

    cb = params["codebook"].astype(jnp.float32)
    w_hat = cb[params["Qidxs"].reshape(-1)].reshape(out_f, in_f)
    h_in = _hadamard(in_f) / jnp.sqrt(jnp.float32(in_f))
    h_out = _hadamard(out_f) / jnp.sqrt(jnp.float32(out_f))

    rso = float(params["resid_scale_override"])
    resid_scale = (1.0 / rso) if rso > 0 else 1.0

    xs = x2d / params["scaleWH"] * params["SU"]
    xh = xs @ h_in
    abx = (xh @ params["B"].T) @ params["A"].T
    z = xh @ w_hat.T + abx * resid_scale
    zh = z @ h_out
    out = zh * (params["SV"] * params["Wscale"]) + params["bias"]
    return out.reshape(lead + (out_f,)).astype(x.dtype)


def make_params(key, in_features, out_features, codesz, rank, cb_size=16):
    ks = jax.random.split(key, 8)
    return dict(
        ocs_dupe_inds=jnp.arange(in_features, dtype=jnp.int32),
        codebook=jax.random.normal(ks[0], (cb_size, codesz), dtype=jnp.float32),
        Qidxs=jax.random.randint(ks[1], (out_features, in_features // codesz),
                                 0, cb_size, dtype=jnp.int32),
        SU=jnp.sign(jax.random.normal(ks[2], (in_features,), dtype=jnp.float32)),
        SV=jnp.sign(jax.random.normal(ks[3], (out_features,), dtype=jnp.float32)),
        Wscale=jnp.float32(0.05),
        scaleWH=jax.random.uniform(ks[4], (in_features,), dtype=jnp.float32,
                                   minval=0.5, maxval=1.5),
        A=0.1 * jax.random.normal(ks[5], (out_features, rank), dtype=jnp.float32),
        B=0.1 * jax.random.normal(ks[6], (rank, in_features), dtype=jnp.float32),
        bias=jnp.ones((out_features,), dtype=jnp.float32),
        resid_scale_override=-1,
    )


if __name__ == "__main__":
    # QuantizedLinear(in=64, out=32, codesz=4, packsz=1, pack_out=False,
    # rank=4, rescale_WH=True, bias=True, outlier_channel_split=True)
    # applied to an activation of shape (2, 8, 64).
    batch, seq = 2, 8
    in_features, out_features = 64, 32
    codesz, rank = 4, 4

    key = jax.random.PRNGKey(0)
    k_x, k_p = jax.random.split(key)
    params = make_params(k_p, in_features, out_features, codesz, rank)
    x = jax.random.normal(k_x, (batch, seq, in_features), dtype=jnp.float32)

    prepped = prepare_quantized_linear(params)      # one-time weight prep
    out = quantized_linear_forward(x, prepped)      # per-call: gather + GEMM
    jax.block_until_ready(out)

    ref = reference_forward(x, params)
    assert out.shape == (batch, seq, out_features)
    # bf16 MXU operands -> relaxed tolerance vs the f32 reference.
    assert jnp.allclose(out, ref, rtol=3e-2, atol=3e-2), "mismatch vs reference"

    print("KERNEL_OK")
</pallas_src>

<mosaic_0001>
module attributes {stable_mosaic.version = 11 : i64} {
  func.func @_qlinear_kernel(%arg0: i32, %arg1: i32, %arg2: i32, %arg3: memref<16x128xbf16, #tpu.memory_space<vmem>>, %arg4: memref<128x128xbf16, #tpu.memory_space<vmem>>, %arg5: memref<1x128xf32, #tpu.memory_space<vmem>>, %arg6: memref<1x128xf32, #tpu.memory_space<vmem>>, %arg7: memref<16x128xf32, #tpu.memory_space<vmem>>, %arg8: memref<16x128xf32, #tpu.memory_space<vmem>>) attributes {dimension_semantics = [#tpu.dimension_semantics<parallel>, #tpu.dimension_semantics<parallel>, #tpu.dimension_semantics<arbitrary>], iteration_bounds = array<i64: 1, 1, 1>, scalar_prefetch = 0 : i64, scratch_operands = 1 : i64, tpu.core_type = #tpu.core_type<tc>, window_params = [{transform_indices = @transform_0, window_bounds = array<i64: 16, 128>}, {transform_indices = @transform_1, window_bounds = array<i64: 128, 128>}, {transform_indices = @transform_2, window_bounds = array<i64: 1, 128>}, {transform_indices = @transform_3, window_bounds = array<i64: 1, 128>}, {transform_indices = @transform_4, window_bounds = array<i64: 16, 128>}]} {
    %c0_i32 = arith.constant 0 : i32
    %0 = arith.cmpi eq, %arg2, %c0_i32 : i32
    %1 = arith.extui %0 : i1 to i32
    %c0_i32_0 = arith.constant 0 : i32
    %2 = arith.cmpi ne, %1, %c0_i32_0 : i32
    scf.if %2 {
      %cst_10 = arith.constant 0.000000e+00 : f32
      %12 = vector.broadcast %cst_10 : f32 to vector<16x128xf32>
      %c0_11 = arith.constant 0 : index
      %c0_12 = arith.constant 0 : index
      %13 = vector.load %arg8[%c0_11, %c0_12] : memref<16x128xf32, #tpu.memory_space<vmem>>, vector<16x128xf32>
      tpu.vector_store %arg8[%c0_11, %c0_12], %12 {strides = array<i32>} : memref<16x128xf32, #tpu.memory_space<vmem>>, vector<16x128xf32>,
    } else {
    }
    %c0 = arith.constant 0 : index
    %c0_1 = arith.constant 0 : index
    %3 = vector.load %arg8[%c0, %c0_1] : memref<16x128xf32, #tpu.memory_space<vmem>>, vector<16x128xf32>
    %c0_2 = arith.constant 0 : index
    %c0_3 = arith.constant 0 : index
    %4 = vector.load %arg3[%c0_2, %c0_3] : memref<16x128xbf16, #tpu.memory_space<vmem>>, vector<16x128xbf16>
    %c0_4 = arith.constant 0 : index
    %c0_5 = arith.constant 0 : index
    %5 = vector.load %arg4[%c0_4, %c0_5] : memref<128x128xbf16, #tpu.memory_space<vmem>>, vector<128x128xbf16>
    %cst = arith.constant dense<0.000000e+00> : vector<16x128xf32>
    %6 = tpu.matmul %4, %5, %cst {dimension_numbers = #tpu.dot_dimension_numbers<[1], [0], [0], [1], [0, 0, 1, 1], [], []>} : vector<16x128xbf16>, vector<128x128xbf16>, vector<16x128xf32> -> vector<16x128xf32>
    %7 = arith.addf %3, %6 : vector<16x128xf32>
    %c0_6 = arith.constant 0 : index
    %c0_7 = arith.constant 0 : index
    %8 = vector.load %arg8[%c0_6, %c0_7] : memref<16x128xf32, #tpu.memory_space<vmem>>, vector<16x128xf32>
    tpu.vector_store %arg8[%c0_6, %c0_7], %7 {strides = array<i32>} : memref<16x128xf32, #tpu.memory_space<vmem>>, vector<16x128xf32>,
    %c0_i32_8 = arith.constant 0 : i32
    %9 = arith.cmpi eq, %arg2, %c0_i32_8 : i32
    %10 = arith.extui %9 : i1 to i32
    %c0_i32_9 = arith.constant 0 : i32
    %11 = arith.cmpi ne, %10, %c0_i32_9 : i32
    scf.if %11 {
      %c0_10 = arith.constant 0 : index
      %c0_11 = arith.constant 0 : index
      %12 = vector.load %arg8[%c0_10, %c0_11] : memref<16x128xf32, #tpu.memory_space<vmem>>, vector<16x128xf32>
      %c0_12 = arith.constant 0 : index
      %c0_13 = arith.constant 0 : index
      %13 = vector.load %arg5[%c0_12, %c0_13] : memref<1x128xf32, #tpu.memory_space<vmem>>, vector<1x128xf32>
      %14 = vector.broadcast %13 : vector<1x128xf32> to vector<16x128xf32>
      %15 = arith.mulf %12, %14 : vector<16x128xf32>
      %c0_14 = arith.constant 0 : index
      %c0_15 = arith.constant 0 : index
      %16 = vector.load %arg6[%c0_14, %c0_15] : memref<1x128xf32, #tpu.memory_space<vmem>>, vector<1x128xf32>
      %17 = vector.broadcast %16 : vector<1x128xf32> to vector<16x128xf32>
      %18 = arith.addf %15, %17 : vector<16x128xf32>
      %c0_16 = arith.constant 0 : index
      %c0_17 = arith.constant 0 : index
      %19 = vector.load %arg7[%c0_16, %c0_17] : memref<16x128xf32, #tpu.memory_space<vmem>>, vector<16x128xf32>
      tpu.vector_store %arg7[%c0_16, %c0_17], %18 {strides = array<i32>} : memref<16x128xf32, #tpu.memory_space<vmem>>, vector<16x128xf32>,
    } else {
    }
    return
  }
  func.func @transform_0(%arg0: i32, %arg1: i32, %arg2: i32) -> (i32, i32) {
    %c0_i32 = arith.constant 0 : i32
    return %arg0, %arg2 : i32, i32
  }
  func.func @transform_1(%arg0: i32, %arg1: i32, %arg2: i32) -> (i32, i32) {
    %c0_i32 = arith.constant 0 : i32
    return %arg2, %arg1 : i32, i32
  }
  func.func @transform_2(%arg0: i32, %arg1: i32, %arg2: i32) -> (i32, i32) {
    %c0_i32 = arith.constant 0 : i32
    %c0_i32_0 = arith.constant 0 : i32
    return %c0_i32, %arg1 : i32, i32
  }
  func.func @transform_3(%arg0: i32, %arg1: i32, %arg2: i32) -> (i32, i32) {
    %c0_i32 = arith.constant 0 : i32
    %c0_i32_0 = arith.constant 0 : i32
    return %c0_i32, %arg1 : i32, i32
  }
  func.func @transform_4(%arg0: i32, %arg1: i32, %arg2: i32) -> (i32, i32) {
    %c0_i32 = arith.constant 0 : i32
    return %arg0, %arg1 : i32, i32
  }
}

</mosaic_0001>

<llo_original>
// kernel: tpu_custom_call.1
$region0: #{tpu_custom_call.1}
  #allocation0 [shape = 'u32[]', space=smem, size = 0x4, offset = 0x4, fixed_abs, tag = 'smem constant byte address 0x4 - core index']
  #allocation1 [shape = 'u32[144,128]{1,0:T(1,128)}', space=vmem, size = 0x12000, scoped, tag = 'internal scratch']
  #allocation2 [shape = 'f32[16,128]{1,0:T(8,128)}', space=vmem, size = 0x2000, scoped, tag = 'scratch operand']
  %s0 = inlined_call_operand.hbm [shape: bf16[16,128], index: 0, kind: input, shape index: {}]
  %s1 = inlined_call_operand.hbm [shape: bf16[128,128], index: 1, kind: input, shape index: {}]
  %s2 = inlined_call_operand.vmem [shape: f32[1,128], index: 2, kind: input, shape index: {}]
  %s3 = inlined_call_operand.vmem [shape: f32[1,128], index: 3, kind: input, shape index: {}]
  %s4 = inlined_call_operand.hbm [shape: f32[16,128], index: 4, kind: output, shape index: {}]
  %s5 = sld [smem:[#allocation0]]
  $region42: #{tpu_custom_call.1} parent=0
    _
  %s7 = ssub.s32 1, %s5
  %s8 = scalar_select 0, %s7, %s5
  $region1: #{tpu_custom_call.1} parent=0
    #allocation3 [shape = 'u8[4096]{0}', space=vmem, size = 0x1000, scoped, tag = 'input window, operand 0, single buffered']
    #allocation4 [shape = 's32[1]{0}', space=sflag, size = 0x4, scoped, tag = 'scoped memory for tpu_custom_call.1']
    #allocation5 [shape = 's32[1]{0}', space=sflag, size = 0x4, scoped, tag = 'scoped memory for tpu_custom_call.1']
    #allocation6 [shape = 'u8[32768]{0}', space=vmem, size = 0x8000, scoped, tag = 'input window, operand 1, single buffered']
    #allocation7 [shape = 's32[1]{0}', space=sflag, size = 0x4, scoped, tag = 'scoped memory for tpu_custom_call.1']
    #allocation8 [shape = 'u8[8192]{0}', space=vmem, size = 0x2000, scoped, tag = 'output window, operand 0, single buffered']
    %9 = vsyncpa [#allocation4], 0
    %10 = vsyncpa [#allocation7], 0
    %11 = vsyncpa [#allocation5], 0
    // Predicated region
    $region2: #{tpu_custom_call.1} parent=1 // pred_check
      _
    $region3: #{tpu_custom_call.1} parent=1 // pred_check_branch
      %13 = sbr.rel (0) target = $region5
    $region4: #{tpu_custom_call.1} parent=1 // pred_region
      %s15 = ssub.s32 128, 128
      %16 = vsyncadd [#allocation4], %s15
      %s17 = sshll.u32 [#allocation3], 4
      %s18 = int_to_ptr.vmem [resolvable:$true] %s17
      %23 = dma.hbm_to_vmem [thread:$0]  %s0, 128, %s18, [#allocation4], 64, 64, 4
    $region5: #{tpu_custom_call.1} parent=1 // pred_fallthru
      _
    // Predicated region
    $region6: #{tpu_custom_call.1} parent=1 // pred_check
      _
    $region7: #{tpu_custom_call.1} parent=1 // pred_check_branch
      %25 = sbr.rel (0) target = $region9
    $region8: #{tpu_custom_call.1} parent=1 // pred_region
      %s27 = ssub.s32 1024, 1024
      %28 = vsyncadd [#allocation7], %s27
      %s29 = sshll.u32 [#allocation6], 4
      %s30 = int_to_ptr.vmem [resolvable:$true] %s29
      %35 = dma.hbm_to_vmem [thread:$0]  %s1, 1024, %s30, [#allocation7], 64, 64, 4
    $region9: #{tpu_custom_call.1} parent=1 // pred_fallthru
      _
    // Predicated region
    $region10: #{tpu_custom_call.1} parent=1 // pred_check
      _
    $region11: #{tpu_custom_call.1} parent=1 // pred_check_branch
      %37 = sbr.rel (0) target = $region13
    $region12: #{tpu_custom_call.1} parent=1 // pred_region
      _
    $region13: #{tpu_custom_call.1} parent=1 // pred_fallthru
      _
    // Predicated region
    $region14: #{tpu_custom_call.1} parent=1 // pred_check
      _
    $region15: #{tpu_custom_call.1} parent=1 // pred_check_branch
      %39 = sbr.rel (0) target = $region17
    $region16: #{tpu_custom_call.1} parent=1 // pred_region
      _
    $region17: #{tpu_custom_call.1} parent=1 // pred_fallthru
      _
    // Predicated region
    $region18: #{tpu_custom_call.1} parent=1 // pred_check
      _
    $region19: #{tpu_custom_call.1} parent=1 // pred_check_branch
      %41 = sbr.rel (0) target = $region21
    $region20: #{tpu_custom_call.1} parent=1 // pred_region
      %42 = dma.done [#allocation4], 128
    $region21: #{tpu_custom_call.1} parent=1 // pred_fallthru
      _
    // Predicated region
    $region22: #{tpu_custom_call.1} parent=1 // pred_check
      _
    $region23: #{tpu_custom_call.1} parent=1 // pred_check_branch
      %44 = sbr.rel (0) target = $region25
    $region24: #{tpu_custom_call.1} parent=1 // pred_region
      %45 = dma.done [#allocation7], 1024
    $region25: #{tpu_custom_call.1} parent=1 // pred_fallthru
      _
    %p47 = scmp.eq.s32.totalorder 0, 0
    // Predicated region
    $region26: #{tpu_custom_call.1} parent=1 // pred_check
      %p48 = pneg %p47
    $region27: #{tpu_custom_call.1} parent=1 // pred_check_branch
      %50 = sbr.rel (%p48) target = $region29
    $region28: #{tpu_custom_call.1} parent=1 // pred_region
      %51 = vst [vmem:[#allocation2] sm:$0xff] 0.0
      %52 = vst [vmem:[#allocation2 + $0x8] sm:$0xff] 0.0
    $region29: #{tpu_custom_call.1} parent=1 // pred_fallthru
      _
    %v53 = vld [vmem:[#allocation2] sm:$0xff]
    %v54 = vld [vmem:[#allocation2 + $0x8] sm:$0xff]
    %v55 = vld [vmem:[#allocation3] sm:$0xf]
    %v56 = vld [vmem:[#allocation3 + $0x4] sm:$0xf]
    %v57 = vld [vmem:[#allocation6] sm:$0xf]
    %v58 = vld [vmem:[#allocation6 + $0x4] sm:$0xf]
    %v59 = vld [vmem:[#allocation6 + $0x8] sm:$0xf]
    %v60 = vld [vmem:[#allocation6 + $0xc] sm:$0xf]
    %v61 = vld [vmem:[#allocation6 + $0x10] sm:$0xf]
    %v62 = vld [vmem:[#allocation6 + $0x14] sm:$0xf]
    %v63 = vld [vmem:[#allocation6 + $0x18] sm:$0xf]
    %v64 = vld [vmem:[#allocation6 + $0x1c] sm:$0xf]
    %v65 = vld [vmem:[#allocation6 + $0x20] sm:$0xf]
    %v66 = vld [vmem:[#allocation6 + $0x24] sm:$0xf]
    %v67 = vld [vmem:[#allocation6 + $0x28] sm:$0xf]
    %v68 = vld [vmem:[#allocation6 + $0x2c] sm:$0xf]
    %v69 = vld [vmem:[#allocation6 + $0x30] sm:$0xf]
    %v70 = vld [vmem:[#allocation6 + $0x34] sm:$0xf]
    %v71 = vld [vmem:[#allocation6 + $0x38] sm:$0xf]
    %v72 = vld [vmem:[#allocation6 + $0x3c] sm:$0xf]
    %v75 = vunpack.c.l.b16 %v55
    %v76 = vunpack.c.l.b16 %v56
    %v77 = vpack.c.b16 %v76, %v75
    %v95 = vunpack.c.l.b16 %v57
    %v96 = vunpack.c.l.b16 %v58
    %v97 = vunpack.c.l.b16 %v59
    %v98 = vunpack.c.l.b16 %v60
    %v99 = vunpack.c.l.b16 %v61
    %v100 = vunpack.c.l.b16 %v62
    %v101 = vunpack.c.l.b16 %v63
    %v102 = vunpack.c.l.b16 %v64
    %v103 = vunpack.c.l.b16 %v65
    %v104 = vunpack.c.l.b16 %v66
    %v105 = vunpack.c.l.b16 %v67
    %v106 = vunpack.c.l.b16 %v68
    %v107 = vunpack.c.l.b16 %v69
    %v108 = vunpack.c.l.b16 %v70
    %v109 = vunpack.c.l.b16 %v71
    %v110 = vunpack.c.l.b16 %v72
    %v111 = vpack.c.b16 %v96, %v95
    %v112 = vpack.c.b16 %v98, %v97
    %v113 = vpack.c.b16 %v100, %v99
    %v114 = vpack.c.b16 %v102, %v101
    %v115 = vpack.c.b16 %v104, %v103
    %v116 = vpack.c.b16 %v106, %v105
    %v117 = vpack.c.b16 %v108, %v107
    %v118 = vpack.c.b16 %v110, %v109
    %127 = vmatprep.subr.bf16.mxu0 0
    %128 = vmatpush1.bf16.msra.mxu0 %v118
    %129 = vmatprep.subr.bf16.mxu0 0
    %130 = vmatpush1.bf16.msra.mxu0 %v117
    %131 = vmatprep.subr.bf16.mxu0 0
    %132 = vmatpush1.bf16.msra.mxu0 %v116
    %133 = vmatprep.subr.bf16.mxu0 0
    %134 = vmatpush1.bf16.msra.mxu0 %v115
    %135 = vmatprep.subr.bf16.mxu0 0
    %136 = vmatpush1.bf16.msra.mxu0 %v114
    %137 = vmatprep.subr.bf16.mxu0 0
    %138 = vmatpush1.bf16.msra.mxu0 %v113
    %139 = vmatprep.subr.bf16.mxu0 0
    %140 = vmatpush1.bf16.msra.mxu0 %v112
    %141 = vmatprep.subr.bf16.mxu0 0
    %142 = vmatpush1.bf16.msra.mxu0 %v111
    %143 = vmatprep.subr.bf16.mxu0 0
    %144 = vmatpush2.bf16.msra.mxu0 0
    %145 = vmatprep.subr.bf16.mxu0 0
    %146 = vmatpush2.bf16.msra.mxu0 0
    %147 = vmatprep.subr.bf16.mxu0 0
    %148 = vmatpush2.bf16.msra.mxu0 0
    %149 = vmatprep.subr.bf16.mxu0 0
    %150 = vmatpush2.bf16.msra.mxu0 0
    %151 = vmatprep.subr.bf16.mxu0 0
    %152 = vmatpush2.bf16.msra.mxu0 0
    %153 = vmatprep.subr.bf16.mxu0 0
    %154 = vmatpush2.bf16.msra.mxu0 0
    %155 = vmatprep.subr.bf16.mxu0 0
    %156 = vmatpush2.bf16.msra.mxu0 0
    %157 = vmatprep.subr.bf16.mxu0 0
    %158 = vmatpush2.bf16.msra.mxu0 0
    %159 = vmatprep.mubr.bf16.mxu0 0
    %160 = vmatmul.mubr.bf16.gmra.mxu0 %v77
    %v161 = vpop.f32.mrf.mxu0
    %v162 = vadd.f32 0.0, %v161
    %v163 = vpop.f32.mrf.mxu0
    %v164 = vpop.f32.mrf.mxu0
    %v165 = vadd.f32 0.0, %v164
    %v166 = vpop.f32.mrf.mxu0
    %167 = vdwg.mxu0
    %v168 = vadd.f32 %v53, %v162
    %v169 = vadd.f32 %v54, %v165
    %170 = vst [vmem:[#allocation2] sm:$0xff] %v168
    %171 = vst [vmem:[#allocation2 + $0x8] sm:$0xff] %v169
    // Predicated region
    $region30: #{tpu_custom_call.1} parent=1 // pred_check
      %p172 = pneg %p47
    $region31: #{tpu_custom_call.1} parent=1 // pred_check_branch
      %174 = sbr.rel (%p172) target = $region33
    $region32: #{tpu_custom_call.1} parent=1 // pred_region
      %v175 = vld [vmem:[#allocation2] sm:$0xff]
      %v176 = vld [vmem:[#allocation2 + $0x8] sm:$0xff]
      %v177 = vld [vmem:[%s2] sm:$0x1]
      %v179 = vlaneseq
      %v180 = vshrl.u32 %v179, 7
      %v181 = vsub.s32 0, %v180
      %v182 = vrot.slane %v177, %v181
      %v184 = vmul.f32 %v175, %v182
      %v185 = vmul.f32 %v176, %v182
      %v186 = vld [vmem:[%s3] sm:$0x1]
      %v188 = vlaneseq
      %v189 = vshrl.u32 %v188, 7
      %v190 = vsub.s32 0, %v189
      %v191 = vrot.slane %v186, %v190
      %v193 = vadd.f32 %v184, %v191
      %v194 = vadd.f32 %v185, %v191
      %195 = vst [vmem:[#allocation8] sm:$0xff] %v193
      %196 = vst [vmem:[#allocation8 + $0x8] sm:$0xff] %v194
    $region33: #{tpu_custom_call.1} parent=1 // pred_fallthru
      _
    // Predicated region
    $region34: #{tpu_custom_call.1} parent=1 // pred_check
      _
    $region35: #{tpu_custom_call.1} parent=1 // pred_check_branch
      %198 = sbr.rel (0) target = $region37
    $region36: #{tpu_custom_call.1} parent=1 // pred_region
      %s200 = ssub.s32 256, 256
      %201 = vsyncadd [#allocation5], %s200
      %s202 = sshll.u32 [#allocation8], 4
      %s203 = int_to_ptr.vmem [resolvable:$true] %s202
      %208 = dma.vmem_to_hbm [thread:$0]  %s203, 256, %s4, [#allocation5], 128, 128, 8
    $region37: #{tpu_custom_call.1} parent=1 // pred_fallthru
      _
    // Predicated region
    $region38: #{tpu_custom_call.1} parent=1 // pred_check
      _
    $region39: #{tpu_custom_call.1} parent=1 // pred_check_branch
      %210 = sbr.rel (0) target = $region41
    $region40: #{tpu_custom_call.1} parent=1 // pred_region
      %211 = dma.done [#allocation5], 256
    $region41: #{tpu_custom_call.1} parent=1 // pred_fallthru
      _
    %212 = vsyncpa [#allocation4], 1
    %213 = vsyncpa [#allocation7], 1
    %214 = vsyncpa [#allocation5], 1

</llo_original>
